<compile_context>
chip_gen: v5e
topology: v5e:2x2
jax: 0.10.0
libtpu: 0.0.40
codegen_flags: <defaults>
</compile_context>

<pallas_src>
from functools import partial

import jax
import jax.numpy as jnp
from jax.experimental import pallas as pl
from jax.experimental.pallas import tpu as pltpu

LAYER = 1        # matches `layer = 1` in the reference script
NODES = 100      # matches `nodes = 100`
IN_DIM = 28 * 28
OUT_DIM = 10

NODES_PAD = 128   # hidden width padded to a full lane dim
OUT_PAD = 128     # output width padded to a full lane dim (lane-dense stores)
TILE_B_MAX = 1024 # batch tile (amortizes per-step overhead; fits VMEM on all gens)


def _round_up(n: int, m: int) -> int:
    return ((n + m - 1) // m) * m


def _pad2d(a, shape):
    return jnp.pad(a, [(0, s - d) for d, s in zip(a.shape, shape)])


def _dnn_kernel(*refs, num_hidden: int):
    """Fused forward for one batch tile. Weights stay resident in VMEM across tiles."""
    if num_hidden > 0:
        x_ref, w1_ref, b1_ref, wh_ref, bh_ref, w2_ref, b2_ref, o_ref = refs
    else:
        x_ref, w1_ref, b1_ref, w2_ref, b2_ref, o_ref = refs

    # In-kernel f32 -> bf16 cast of the activation tile (single HBM read of x as f32).
    x = x_ref[...].astype(jnp.bfloat16)

    # x = relu(fc1(x))  -- bf16 MXU inputs, f32 accumulation, f32 bias/ReLU
    h = jnp.dot(x, w1_ref[...], preferred_element_type=jnp.float32)
    h = jnp.maximum(h + b1_ref[...], 0.0)

    # for i in range(LAYER - 1): x = relu(fc_hidden(x))   (static trace-time loop)
    for _ in range(num_hidden):
        h = jnp.dot(h.astype(jnp.bfloat16), wh_ref[...],
                    preferred_element_type=jnp.float32)
        h = jnp.maximum(h + bh_ref[...], 0.0)

    # x = fc2(x)  (no activation); padded output lanes are exactly zero-contribution.
    out = jnp.dot(h.astype(jnp.bfloat16), w2_ref[...],
                  preferred_element_type=jnp.float32) + b2_ref[...]
    o_ref[...] = out.astype(o_ref.dtype)   # bf16 writeback (halves output HBM traffic)


def pack_params(w1, b1, wh, bh, w2, b2):
    """One-time weight packing: pad feature dims to 128 lanes, cast weights to bf16."""
    packed = {
        "w1": _pad2d(w1, (IN_DIM, NODES_PAD)).astype(jnp.bfloat16),
        "b1": _pad2d(b1, (1, NODES_PAD)).astype(jnp.float32),
        "w2": _pad2d(w2, (NODES_PAD, OUT_PAD)).astype(jnp.bfloat16),
        "b2": _pad2d(b2, (1, OUT_PAD)).astype(jnp.float32),
    }
    if LAYER - 1 > 0:
        packed["wh"] = _pad2d(wh, (NODES_PAD, NODES_PAD)).astype(jnp.bfloat16)
        packed["bh"] = _pad2d(bh, (1, NODES_PAD)).astype(jnp.float32)
    return packed


def dnn_forward(x, params):
    """Flatten like x.view(-1, 28*28), tile over batch, run the fused kernel."""
    x2d = x.reshape(-1, IN_DIM).astype(jnp.float32)   # stays f32; cast happens in-kernel
    B = x2d.shape[0]
    num_hidden = LAYER - 1

    # Batch tile: large enough to amortize ~0.35us/step overhead; for moderate batches
    # keep >=2 balanced grid steps so v7x's two TensorCores both get work.
    tile_b = max(8, min(TILE_B_MAX, _round_up(pl.cdiv(B, 2), 8)))
    grid_b = pl.cdiv(B, tile_b)   # ragged tail handled by Pallas masking (no jnp.pad of x)

    resident = lambda shape: pl.BlockSpec(shape, lambda i: (0, 0))

    in_specs = [
        pl.BlockSpec((tile_b, IN_DIM), lambda i: (i, 0)),   # f32 activation tile, pipelined
        resident((IN_DIM, NODES_PAD)),                      # w1 resident
        resident((1, NODES_PAD)),                           # b1 resident
    ]
    args = [x2d, params["w1"], params["b1"]]
    if num_hidden > 0:
        in_specs += [resident((NODES_PAD, NODES_PAD)), resident((1, NODES_PAD))]
        args += [params["wh"], params["bh"]]
    in_specs += [resident((NODES_PAD, OUT_PAD)), resident((1, OUT_PAD))]
    args += [params["w2"], params["b2"]]

    rows = grid_b * tile_b
    flops = 2 * rows * (IN_DIM * NODES_PAD
                        + num_hidden * NODES_PAD * NODES_PAD
                        + NODES_PAD * OUT_PAD)
    bytes_accessed = (B * IN_DIM * 4                                        # x (f32, read once)
                      + sum(int(a.size) * a.dtype.itemsize for a in args[1:])  # weights/biases
                      + B * OUT_PAD * 2)                                     # bf16 output

    out = pl.pallas_call(
        partial(_dnn_kernel, num_hidden=num_hidden),
        out_shape=jax.ShapeDtypeStruct((B, OUT_PAD), jnp.bfloat16),
        grid=(grid_b,),
        in_specs=in_specs,
        out_specs=pl.BlockSpec((tile_b, OUT_PAD), lambda i: (i, 0)),
        compiler_params=pltpu.CompilerParams(
            dimension_semantics=("parallel",),
        ),
        cost_estimate=pl.CostEstimate(
            flops=flops, transcendentals=0, bytes_accessed=bytes_accessed),
    )(*args)

    # Strip padded output lanes; return f32 logits (tiny slice+cast).
    return out[:, :OUT_DIM].astype(jnp.float32)


def init_linear(key, fan_in, fan_out):
    # Deterministic init mimicking torch.nn.Linear default (U[-1/sqrt(fan_in), 1/sqrt(fan_in)]).
    kw, kb = jax.random.split(key)
    bound = 1.0 / jnp.sqrt(jnp.float32(fan_in))
    # stored as (in, out) so the kernel does x @ W
    w = jax.random.uniform(kw, (fan_in, fan_out), jnp.float32, -bound, bound)
    b = jax.random.uniform(kb, (1, fan_out), jnp.float32, -bound, bound)
    return w, b


def _reference(x, w1, b1, wh, bh, w2, b2):
    # Same mixed-precision math as the kernel (bf16 MXU inputs, f32 accumulation,
    # bf16 final writeback) in plain JAX.
    h = jnp.dot(x.reshape(-1, IN_DIM).astype(jnp.bfloat16), w1.astype(jnp.bfloat16),
                preferred_element_type=jnp.float32)
    h = jnp.maximum(h + b1, 0.0)
    for _ in range(LAYER - 1):
        h = jnp.dot(h.astype(jnp.bfloat16), wh.astype(jnp.bfloat16),
                    preferred_element_type=jnp.float32)
        h = jnp.maximum(h + bh, 0.0)
    out = jnp.dot(h.astype(jnp.bfloat16), w2.astype(jnp.bfloat16),
                  preferred_element_type=jnp.float32) + b2
    return out.astype(jnp.bfloat16).astype(jnp.float32)


if __name__ == "__main__":
    key = jax.random.PRNGKey(0)
    k_x, k1, kh, k2 = jax.random.split(key, 4)

    # Small MNIST-like batch: (B, 1, 28, 28) NCHW, flattened by forward()
    B = 8
    x = jax.random.normal(k_x, (B, 1, 28, 28), jnp.float32)

    w1, b1 = init_linear(k1, IN_DIM, NODES)
    wh, bh = init_linear(kh, NODES, NODES)
    w2, b2 = init_linear(k2, IN_DIM and NODES, OUT_DIM)

    params = pack_params(w1, b1, wh, bh, w2, b2)   # packed once, outside the hot path
    fwd = jax.jit(dnn_forward)

    out = fwd(x, params)
    jax.block_until_ready(out)
    assert out.shape == (B, OUT_DIM)
    assert out.dtype == jnp.float32

    # Correctness vs identical mixed-precision JAX reference (incl. bf16 writeback).
    ref = _reference(x, w1, b1, wh, bh, w2, b2)
    assert jnp.allclose(out, ref, atol=2e-3, rtol=2e-3), float(jnp.max(jnp.abs(out - ref)))

    # Sanity vs full-f32 reference (loose tolerance: bf16 MXU inputs + bf16 writeback).
    x2d = x.reshape(-1, IN_DIM)
    ref32 = jnp.maximum(x2d @ w1 + b1, 0.0)
    for _ in range(LAYER - 1):
        ref32 = jnp.maximum(ref32 @ wh + bh, 0.0)
    ref32 = ref32 @ w2 + b2
    assert jnp.allclose(out, ref32, atol=1e-1, rtol=1e-1)

    print("KERNEL_OK")
</pallas_src>

<mosaic_0001>
module attributes {stable_mosaic.version = 11 : i64} {
  func.func @_dnn_kernel(%arg0: i32, %arg1: memref<8x784xf32, #tpu.memory_space<vmem>>, %arg2: memref<784x128xbf16, #tpu.memory_space<vmem>>, %arg3: memref<1x128xf32, #tpu.memory_space<vmem>>, %arg4: memref<128x128xbf16, #tpu.memory_space<vmem>>, %arg5: memref<1x128xf32, #tpu.memory_space<vmem>>, %arg6: memref<8x128xbf16, #tpu.memory_space<vmem>>) attributes {dimension_semantics = [#tpu.dimension_semantics<parallel>], iteration_bounds = array<i64: 1>, scalar_prefetch = 0 : i64, scratch_operands = 0 : i64, tpu.core_type = #tpu.core_type<tc>, window_params = [{transform_indices = @transform_0, window_bounds = array<i64: 8, 784>}, {pipeline_mode = #tpu.pipeline_mode<synchronous>, transform_indices = @transform_1, window_bounds = array<i64: 784, 128>}, {pipeline_mode = #tpu.pipeline_mode<synchronous>, transform_indices = @transform_2, window_bounds = array<i64: 1, 128>}, {pipeline_mode = #tpu.pipeline_mode<synchronous>, transform_indices = @transform_3, window_bounds = array<i64: 128, 128>}, {pipeline_mode = #tpu.pipeline_mode<synchronous>, transform_indices = @transform_4, window_bounds = array<i64: 1, 128>}, {transform_indices = @transform_5, window_bounds = array<i64: 8, 128>}]} {
    %c0 = arith.constant 0 : index
    %c0_0 = arith.constant 0 : index
    %0 = vector.load %arg1[%c0, %c0_0] : memref<8x784xf32, #tpu.memory_space<vmem>>, vector<8x784xf32>
    %1 = arith.truncf %0 : vector<8x784xf32> to vector<8x784xbf16>
    %c0_1 = arith.constant 0 : index
    %c0_2 = arith.constant 0 : index
    %2 = vector.load %arg2[%c0_1, %c0_2] : memref<784x128xbf16, #tpu.memory_space<vmem>>, vector<784x128xbf16>
    %cst = arith.constant dense<0.000000e+00> : vector<8x128xf32>
    %3 = tpu.matmul %1, %2, %cst {dimension_numbers = #tpu.dot_dimension_numbers<[1], [0], [0], [1], [0, 0, 1, 1], [], []>} : vector<8x784xbf16>, vector<784x128xbf16>, vector<8x128xf32> -> vector<8x128xf32>
    %c0_3 = arith.constant 0 : index
    %c0_4 = arith.constant 0 : index
    %4 = vector.load %arg3[%c0_3, %c0_4] : memref<1x128xf32, #tpu.memory_space<vmem>>, vector<1x128xf32>
    %5 = vector.broadcast %4 : vector<1x128xf32> to vector<8x128xf32>
    %6 = arith.addf %3, %5 : vector<8x128xf32>
    %cst_5 = arith.constant 0.000000e+00 : f32
    %7 = vector.broadcast %cst_5 : f32 to vector<8x128xf32>
    %8 = arith.maximumf %6, %7 : vector<8x128xf32>
    %9 = arith.truncf %8 : vector<8x128xf32> to vector<8x128xbf16>
    %c0_6 = arith.constant 0 : index
    %c0_7 = arith.constant 0 : index
    %10 = vector.load %arg4[%c0_6, %c0_7] : memref<128x128xbf16, #tpu.memory_space<vmem>>, vector<128x128xbf16>
    %cst_8 = arith.constant dense<0.000000e+00> : vector<8x128xf32>
    %11 = tpu.matmul %9, %10, %cst_8 {dimension_numbers = #tpu.dot_dimension_numbers<[1], [0], [0], [1], [0, 0, 1, 1], [], []>} : vector<8x128xbf16>, vector<128x128xbf16>, vector<8x128xf32> -> vector<8x128xf32>
    %c0_9 = arith.constant 0 : index
    %c0_10 = arith.constant 0 : index
    %12 = vector.load %arg5[%c0_9, %c0_10] : memref<1x128xf32, #tpu.memory_space<vmem>>, vector<1x128xf32>
    %13 = vector.broadcast %12 : vector<1x128xf32> to vector<8x128xf32>
    %14 = arith.addf %11, %13 : vector<8x128xf32>
    %15 = arith.truncf %14 : vector<8x128xf32> to vector<8x128xbf16>
    %c0_11 = arith.constant 0 : index
    %c0_12 = arith.constant 0 : index
    %16 = vector.load %arg6[%c0_11, %c0_12] : memref<8x128xbf16, #tpu.memory_space<vmem>>, vector<8x128xbf16>
    tpu.vector_store %arg6[%c0_11, %c0_12], %15 {strides = array<i32>} : memref<8x128xbf16, #tpu.memory_space<vmem>>, vector<8x128xbf16>,
    return
  }
  func.func @transform_0(%arg0: i32) -> (i32, i32) {
    %c0_i32 = arith.constant 0 : i32
    %c0_i32_0 = arith.constant 0 : i32
    return %arg0, %c0_i32 : i32, i32
  }
  func.func @transform_1(%arg0: i32) -> (i32, i32) {
    %c0_i32 = arith.constant 0 : i32
    %c0_i32_0 = arith.constant 0 : i32
    %c0_i32_1 = arith.constant 0 : i32
    return %c0_i32, %c0_i32_0 : i32, i32
  }
  func.func @transform_2(%arg0: i32) -> (i32, i32) {
    %c0_i32 = arith.constant 0 : i32
    %c0_i32_0 = arith.constant 0 : i32
    %c0_i32_1 = arith.constant 0 : i32
    return %c0_i32, %c0_i32_0 : i32, i32
  }
  func.func @transform_3(%arg0: i32) -> (i32, i32) {
    %c0_i32 = arith.constant 0 : i32
    %c0_i32_0 = arith.constant 0 : i32
    %c0_i32_1 = arith.constant 0 : i32
    return %c0_i32, %c0_i32_0 : i32, i32
  }
  func.func @transform_4(%arg0: i32) -> (i32, i32) {
    %c0_i32 = arith.constant 0 : i32
    %c0_i32_0 = arith.constant 0 : i32
    %c0_i32_1 = arith.constant 0 : i32
    return %c0_i32, %c0_i32_0 : i32, i32
  }
  func.func @transform_5(%arg0: i32) -> (i32, i32) {
    %c0_i32 = arith.constant 0 : i32
    %c0_i32_0 = arith.constant 0 : i32
    return %arg0, %c0_i32 : i32, i32
  }
}

</mosaic_0001>

<llo_original>
// kernel: dnn_forward.1
$region0: #{dnn_forward.1}
  #allocation0 [shape = 'u32[]', space=smem, size = 0x4, offset = 0x4, fixed_abs, tag = 'smem constant byte address 0x4 - core index']
  #allocation1 [shape = 'u32[72,128]{1,0:T(1,128)}', space=vmem, size = 0x9000, scoped, tag = 'internal scratch']
  %s0 = inlined_call_operand.vmem [shape: f32[8,784], index: 0, kind: input, shape index: {}]
  %s1 = inlined_call_operand.vmem [shape: bf16[784,128], index: 1, kind: input, shape index: {}]
  %s2 = inlined_call_operand.vmem [shape: f32[1,128], index: 2, kind: input, shape index: {}]
  %s3 = inlined_call_operand.vmem [shape: bf16[128,128], index: 3, kind: input, shape index: {}]
  %s4 = inlined_call_operand.vmem [shape: f32[1,128], index: 4, kind: input, shape index: {}]
  %s5 = inlined_call_operand.vmem [shape: bf16[8,128], index: 5, kind: output, shape index: {}]
  %s6 = sld [smem:[#allocation0]]
  $region30: #{dnn_forward.1} parent=0
    _
  %s8 = ssub.s32 1, %s6
  %s9 = scalar_select 0, %s8, %s6
  // Predicated region
  $region2: #{dnn_forward.1} parent=0 // pred_check
    _
  $region3: #{dnn_forward.1} parent=0 // pred_check_branch
    %11 = sbr.rel (0) target = $region5
  $region4: #{dnn_forward.1} parent=0 // pred_region
    _
  $region5: #{dnn_forward.1} parent=0 // pred_fallthru
    _
  // Predicated region
  $region6: #{dnn_forward.1} parent=0 // pred_check
    _
  $region7: #{dnn_forward.1} parent=0 // pred_check_branch
    %13 = sbr.rel (0) target = $region9
  $region8: #{dnn_forward.1} parent=0 // pred_region
    _
  $region9: #{dnn_forward.1} parent=0 // pred_fallthru
    _
  // Predicated region
  $region10: #{dnn_forward.1} parent=0 // pred_check
    _
  $region11: #{dnn_forward.1} parent=0 // pred_check_branch
    %15 = sbr.rel (0) target = $region13
  $region12: #{dnn_forward.1} parent=0 // pred_region
    _
  $region13: #{dnn_forward.1} parent=0 // pred_fallthru
    _
  // Predicated region
  $region14: #{dnn_forward.1} parent=0 // pred_check
    _
  $region15: #{dnn_forward.1} parent=0 // pred_check_branch
    %17 = sbr.rel (0) target = $region17
  $region16: #{dnn_forward.1} parent=0 // pred_region
    _
  $region17: #{dnn_forward.1} parent=0 // pred_fallthru
    _
  // Predicated region
  $region18: #{dnn_forward.1} parent=0 // pred_check
    _
  $region19: #{dnn_forward.1} parent=0 // pred_check_branch
    %19 = sbr.rel (0) target = $region21
  $region20: #{dnn_forward.1} parent=0 // pred_region
    _
  $region21: #{dnn_forward.1} parent=0 // pred_fallthru
    _
  %v21 = vld [vmem:[%s0] sm:$0xff]
  %v22 = vld [vmem:[%s0 + $0x8] sm:$0xff]
  %v23 = vld [vmem:[%s0 + $0x10] sm:$0xff]
  %v24 = vld [vmem:[%s0 + $0x18] sm:$0xff]
  %v25 = vld [vmem:[%s0 + $0x20] sm:$0xff]
  %v26 = vld [vmem:[%s0 + $0x28] sm:$0xff]
  %v27 = vld [vmem:[%s0 + $0x30] sm:$0xff]
  %v28 = vpack.c.bf16 %v21, %v21
  %v29 = vpack.c.bf16 %v22, %v22
  %v30 = vpack.c.bf16 %v23, %v23
  %v31 = vpack.c.bf16 %v24, %v24
  %v32 = vpack.c.bf16 %v25, %v25
  %v33 = vpack.c.bf16 %v26, %v26
  %v34 = vpack.c.bf16 %v27, %v27
  %v35 = vld [vmem:[%s1] sm:$0xf]
  %v36 = vld [vmem:[%s1 + $0x4] sm:$0xf]
  %v37 = vld [vmem:[%s1 + $0x8] sm:$0xf]
  %v38 = vld [vmem:[%s1 + $0xc] sm:$0xf]
  %v39 = vld [vmem:[%s1 + $0x10] sm:$0xf]
  %v40 = vld [vmem:[%s1 + $0x14] sm:$0xf]
  %v41 = vld [vmem:[%s1 + $0x18] sm:$0xf]
  %v42 = vld [vmem:[%s1 + $0x1c] sm:$0xf]
  %v43 = vld [vmem:[%s1 + $0x20] sm:$0xf]
  %v44 = vld [vmem:[%s1 + $0x24] sm:$0xf]
  %v45 = vld [vmem:[%s1 + $0x28] sm:$0xf]
  %v46 = vld [vmem:[%s1 + $0x2c] sm:$0xf]
  %v47 = vld [vmem:[%s1 + $0x30] sm:$0xf]
  %v48 = vld [vmem:[%s1 + $0x34] sm:$0xf]
  %v49 = vld [vmem:[%s1 + $0x38] sm:$0xf]
  %v50 = vld [vmem:[%s1 + $0x3c] sm:$0xf]
  %v51 = vld [vmem:[%s1 + $0x40] sm:$0xf]
  %v52 = vld [vmem:[%s1 + $0x44] sm:$0xf]
  %v53 = vld [vmem:[%s1 + $0x48] sm:$0xf]
  %v54 = vld [vmem:[%s1 + $0x4c] sm:$0xf]
  %v55 = vld [vmem:[%s1 + $0x50] sm:$0xf]
  %v56 = vld [vmem:[%s1 + $0x54] sm:$0xf]
  %v57 = vld [vmem:[%s1 + $0x58] sm:$0xf]
  %v58 = vld [vmem:[%s1 + $0x5c] sm:$0xf]
  %v59 = vld [vmem:[%s1 + $0x60] sm:$0xf]
  %v60 = vld [vmem:[%s1 + $0x64] sm:$0xf]
  %v61 = vld [vmem:[%s1 + $0x68] sm:$0xf]
  %v62 = vld [vmem:[%s1 + $0x6c] sm:$0xf]
  %v63 = vld [vmem:[%s1 + $0x70] sm:$0xf]
  %v64 = vld [vmem:[%s1 + $0x74] sm:$0xf]
  %v65 = vld [vmem:[%s1 + $0x78] sm:$0xf]
  %v66 = vld [vmem:[%s1 + $0x7c] sm:$0xf]
  %v67 = vld [vmem:[%s1 + $0x80] sm:$0xf]
  %v68 = vld [vmem:[%s1 + $0x84] sm:$0xf]
  %v69 = vld [vmem:[%s1 + $0x88] sm:$0xf]
  %v70 = vld [vmem:[%s1 + $0x8c] sm:$0xf]
  %v71 = vld [vmem:[%s1 + $0x90] sm:$0xf]
  %v72 = vld [vmem:[%s1 + $0x94] sm:$0xf]
  %v73 = vld [vmem:[%s1 + $0x98] sm:$0xf]
  %v74 = vld [vmem:[%s1 + $0x9c] sm:$0xf]
  %v75 = vld [vmem:[%s1 + $0xa0] sm:$0xf]
  %v76 = vld [vmem:[%s1 + $0xa4] sm:$0xf]
  %v77 = vld [vmem:[%s1 + $0xa8] sm:$0xf]
  %v78 = vld [vmem:[%s1 + $0xac] sm:$0xf]
  %v79 = vld [vmem:[%s1 + $0xb0] sm:$0xf]
  %v80 = vld [vmem:[%s1 + $0xb4] sm:$0xf]
  %v81 = vld [vmem:[%s1 + $0xb8] sm:$0xf]
  %v82 = vld [vmem:[%s1 + $0xbc] sm:$0xf]
  %v83 = vld [vmem:[%s1 + $0xc0] sm:$0xf]
  %v84 = vld [vmem:[%s1 + $0xc4] sm:$0xf]
  %v85 = vld [vmem:[%s1 + $0xc8] sm:$0xf]
  %v86 = vld [vmem:[%s1 + $0xcc] sm:$0xf]
  %v87 = vld [vmem:[%s1 + $0xd0] sm:$0xf]
  %v88 = vld [vmem:[%s1 + $0xd4] sm:$0xf]
  %v89 = vld [vmem:[%s1 + $0xd8] sm:$0xf]
  %v90 = vld [vmem:[%s1 + $0xdc] sm:$0xf]
  %v91 = vld [vmem:[%s1 + $0xe0] sm:$0xf]
  %v92 = vld [vmem:[%s1 + $0xe4] sm:$0xf]
  %v93 = vld [vmem:[%s1 + $0xe8] sm:$0xf]
  %v94 = vld [vmem:[%s1 + $0xec] sm:$0xf]
  %v95 = vld [vmem:[%s1 + $0xf0] sm:$0xf]
  %v96 = vld [vmem:[%s1 + $0xf4] sm:$0xf]
  %v97 = vld [vmem:[%s1 + $0xf8] sm:$0xf]
  %v98 = vld [vmem:[%s1 + $0xfc] sm:$0xf]
  %v99 = vld [vmem:[%s1 + $0x100] sm:$0xf]
  %v100 = vld [vmem:[%s1 + $0x104] sm:$0xf]
  %v101 = vld [vmem:[%s1 + $0x108] sm:$0xf]
  %v102 = vld [vmem:[%s1 + $0x10c] sm:$0xf]
  %v103 = vld [vmem:[%s1 + $0x110] sm:$0xf]
  %v104 = vld [vmem:[%s1 + $0x114] sm:$0xf]
  %v105 = vld [vmem:[%s1 + $0x118] sm:$0xf]
  %v106 = vld [vmem:[%s1 + $0x11c] sm:$0xf]
  %v107 = vld [vmem:[%s1 + $0x120] sm:$0xf]
  %v108 = vld [vmem:[%s1 + $0x124] sm:$0xf]
  %v109 = vld [vmem:[%s1 + $0x128] sm:$0xf]
  %v110 = vld [vmem:[%s1 + $0x12c] sm:$0xf]
  %v111 = vld [vmem:[%s1 + $0x130] sm:$0xf]
  %v112 = vld [vmem:[%s1 + $0x134] sm:$0xf]
  %v113 = vld [vmem:[%s1 + $0x138] sm:$0xf]
  %v114 = vld [vmem:[%s1 + $0x13c] sm:$0xf]
  %v115 = vld [vmem:[%s1 + $0x140] sm:$0xf]
  %v116 = vld [vmem:[%s1 + $0x144] sm:$0xf]
  %v117 = vld [vmem:[%s1 + $0x148] sm:$0xf]
  %v118 = vld [vmem:[%s1 + $0x14c] sm:$0xf]
  %v119 = vld [vmem:[%s1 + $0x150] sm:$0xf]
  %v120 = vld [vmem:[%s1 + $0x154] sm:$0xf]
  %v121 = vld [vmem:[%s1 + $0x158] sm:$0xf]
  %v122 = vld [vmem:[%s1 + $0x15c] sm:$0xf]
  %v123 = vld [vmem:[%s1 + $0x160] sm:$0xf]
  %v124 = vld [vmem:[%s1 + $0x164] sm:$0xf]
  %v125 = vld [vmem:[%s1 + $0x168] sm:$0xf]
  %v126 = vld [vmem:[%s1 + $0x16c] sm:$0xf]
  %v127 = vld [vmem:[%s1 + $0x170] sm:$0xf]
  %v128 = vld [vmem:[%s1 + $0x174] sm:$0xf]
  %v129 = vld [vmem:[%s1 + $0x178] sm:$0xf]
  %v130 = vld [vmem:[%s1 + $0x17c] sm:$0xf]
  %v131 = vld [vmem:[%s1 + $0x180] sm:$0xf]
  %v132 = vld [vmem:[%s1 + $0x184] sm:$0xf]
  %v133 = vld [vmem:[%s2] sm:$0x1]
  %v135 = vperm.slane %v133, 0
  %v235 = vunpack.c.l.b16 %v35
  %v236 = vunpack.c.l.b16 %v36
  %v237 = vunpack.c.l.b16 %v37
  %v238 = vunpack.c.l.b16 %v38
  %v239 = vunpack.c.l.b16 %v39
  %v240 = vunpack.c.l.b16 %v40
  %v241 = vunpack.c.l.b16 %v41
  %v242 = vunpack.c.l.b16 %v42
  %v243 = vunpack.c.l.b16 %v43
  %v244 = vunpack.c.l.b16 %v44
  %v245 = vunpack.c.l.b16 %v45
  %v246 = vunpack.c.l.b16 %v46
  %v247 = vunpack.c.l.b16 %v47
  %v248 = vunpack.c.l.b16 %v48
  %v249 = vunpack.c.l.b16 %v49
  %v250 = vunpack.c.l.b16 %v50
  %v251 = vunpack.c.l.b16 %v51
  %v252 = vunpack.c.l.b16 %v52
  %v253 = vunpack.c.l.b16 %v53
  %v254 = vunpack.c.l.b16 %v54
  %v255 = vunpack.c.l.b16 %v55
  %v256 = vunpack.c.l.b16 %v56
  %v257 = vunpack.c.l.b16 %v57
  %v258 = vunpack.c.l.b16 %v58
  %v259 = vunpack.c.l.b16 %v59
  %v260 = vunpack.c.l.b16 %v60
  %v261 = vunpack.c.l.b16 %v61
  %v262 = vunpack.c.l.b16 %v62
  %v263 = vunpack.c.l.b16 %v63
  %v264 = vunpack.c.l.b16 %v64
  %v265 = vunpack.c.l.b16 %v65
  %v266 = vunpack.c.l.b16 %v66
  %v267 = vunpack.c.l.b16 %v67
  %v268 = vunpack.c.l.b16 %v68
  %v269 = vunpack.c.l.b16 %v69
  %v270 = vunpack.c.l.b16 %v70
  %v271 = vunpack.c.l.b16 %v71
  %v272 = vunpack.c.l.b16 %v72
  %v273 = vunpack.c.l.b16 %v73
  %v274 = vunpack.c.l.b16 %v74
  %v275 = vunpack.c.l.b16 %v75
  %v276 = vunpack.c.l.b16 %v76
  %v277 = vunpack.c.l.b16 %v77
  %v278 = vunpack.c.l.b16 %v78
  %v279 = vunpack.c.l.b16 %v79
  %v280 = vunpack.c.l.b16 %v80
  %v281 = vunpack.c.l.b16 %v81
  %v282 = vunpack.c.l.b16 %v82
  %v283 = vunpack.c.l.b16 %v83
  %v284 = vunpack.c.l.b16 %v84
  %v285 = vunpack.c.l.b16 %v85
  %v286 = vunpack.c.l.b16 %v86
  %v287 = vunpack.c.l.b16 %v87
  %v288 = vunpack.c.l.b16 %v88
  %v289 = vunpack.c.l.b16 %v89
  %v290 = vunpack.c.l.b16 %v90
  %v291 = vunpack.c.l.b16 %v91
  %v292 = vunpack.c.l.b16 %v92
  %v293 = vunpack.c.l.b16 %v93
  %v294 = vunpack.c.l.b16 %v94
  %v295 = vunpack.c.l.b16 %v95
  %v296 = vunpack.c.l.b16 %v96
  %v297 = vunpack.c.l.b16 %v97
  %v298 = vunpack.c.l.b16 %v98
  %v299 = vunpack.c.l.b16 %v99
  %v300 = vunpack.c.l.b16 %v100
  %v301 = vunpack.c.l.b16 %v101
  %v302 = vunpack.c.l.b16 %v102
  %v303 = vunpack.c.l.b16 %v103
  %v304 = vunpack.c.l.b16 %v104
  %v305 = vunpack.c.l.b16 %v105
  %v306 = vunpack.c.l.b16 %v106
  %v307 = vunpack.c.l.b16 %v107
  %v308 = vunpack.c.l.b16 %v108
  %v309 = vunpack.c.l.b16 %v109
  %v310 = vunpack.c.l.b16 %v110
  %v311 = vunpack.c.l.b16 %v111
  %v312 = vunpack.c.l.b16 %v112
  %v313 = vunpack.c.l.b16 %v113
  %v314 = vunpack.c.l.b16 %v114
  %v315 = vunpack.c.l.b16 %v115
  %v316 = vunpack.c.l.b16 %v116
  %v317 = vunpack.c.l.b16 %v117
  %v318 = vunpack.c.l.b16 %v118
  %v319 = vunpack.c.l.b16 %v119
  %v320 = vunpack.c.l.b16 %v120
  %v321 = vunpack.c.l.b16 %v121
  %v322 = vunpack.c.l.b16 %v122
  %v323 = vunpack.c.l.b16 %v123
  %v324 = vunpack.c.l.b16 %v124
  %v325 = vunpack.c.l.b16 %v125
  %v326 = vunpack.c.l.b16 %v126
  %v327 = vunpack.c.l.b16 %v127
  %v328 = vunpack.c.l.b16 %v128
  %v329 = vunpack.c.l.b16 %v129
  %v330 = vunpack.c.l.b16 %v130
  %v331 = vunpack.c.l.b16 %v131
  %v332 = vunpack.c.l.b16 %v132
  %v333 = vpack.c.b16 %v236, %v235
  %v334 = vpack.c.b16 %v238, %v237
  %v335 = vpack.c.b16 %v240, %v239
  %v336 = vpack.c.b16 %v242, %v241
  %v337 = vpack.c.b16 %v244, %v243
  %v338 = vpack.c.b16 %v246, %v245
  %v339 = vpack.c.b16 %v248, %v247
  %v340 = vpack.c.b16 %v250, %v249
  %v341 = vpack.c.b16 %v252, %v251
  %v342 = vpack.c.b16 %v254, %v253
  %v343 = vpack.c.b16 %v256, %v255
  %v344 = vpack.c.b16 %v258, %v257
  %v345 = vpack.c.b16 %v260, %v259
  %v346 = vpack.c.b16 %v262, %v261
  %v347 = vpack.c.b16 %v264, %v263
  %v348 = vpack.c.b16 %v266, %v265
  %v349 = vpack.c.b16 %v268, %v267
  %v350 = vpack.c.b16 %v270, %v269
  %v351 = vpack.c.b16 %v272, %v271
  %v352 = vpack.c.b16 %v274, %v273
  %v353 = vpack.c.b16 %v276, %v275
  %v354 = vpack.c.b16 %v278, %v277
  %v355 = vpack.c.b16 %v280, %v279
  %v356 = vpack.c.b16 %v282, %v281
  %v357 = vpack.c.b16 %v284, %v283
  %v358 = vpack.c.b16 %v286, %v285
  %v359 = vpack.c.b16 %v288, %v287
  %v360 = vpack.c.b16 %v290, %v289
  %v361 = vpack.c.b16 %v292, %v291
  %v362 = vpack.c.b16 %v294, %v293
  %v363 = vpack.c.b16 %v296, %v295
  %v364 = vpack.c.b16 %v298, %v297
  %v365 = vpack.c.b16 %v300, %v299
  %v366 = vpack.c.b16 %v302, %v301
  %v367 = vpack.c.b16 %v304, %v303
  %v368 = vpack.c.b16 %v306, %v305
  %v369 = vpack.c.b16 %v308, %v307
  %v370 = vpack.c.b16 %v310, %v309
  %v371 = vpack.c.b16 %v312, %v311
  %v372 = vpack.c.b16 %v314, %v313
  %v373 = vpack.c.b16 %v316, %v315
  %v374 = vpack.c.b16 %v318, %v317
  %v375 = vpack.c.b16 %v320, %v319
  %v376 = vpack.c.b16 %v322, %v321
  %v377 = vpack.c.b16 %v324, %v323
  %v378 = vpack.c.b16 %v326, %v325
  %v379 = vpack.c.b16 %v328, %v327
  %v380 = vpack.c.b16 %v330, %v329
  %v381 = vpack.c.b16 %v332, %v331
  %vm431 = vcmask 130048
  %v433 = vsel %vm431, %v34, 0
  %435 = vmatpush.bf16.msra.mxu0 %v340
  %436 = vmatpush.bf16.msra.mxu0 %v339
  %437 = vmatpush.bf16.msra.mxu0 %v338
  %438 = vmatpush.bf16.msra.mxu0 %v337
  %439 = vmatpush.bf16.msra.mxu0 %v336
  %440 = vmatpush.bf16.msra.mxu0 %v335
  %441 = vmatpush.bf16.msra.mxu0 %v334
  %442 = vmatpush.bf16.msra.mxu0 %v333
  %443 = vmatmul.bf16.gmra.mxu0 %v28
  %v444 = vpop.f32.mrf.mxu0
  %v445 = vadd.f32 %v135, %v444
  %v446 = vpop.f32.mrf.mxu0
  %447 = vdwg.mxu0
  %448 = vmatpush.bf16.msra.mxu0 %v348
  %449 = vmatpush.bf16.msra.mxu0 %v347
  %450 = vmatpush.bf16.msra.mxu0 %v346
  %451 = vmatpush.bf16.msra.mxu0 %v345
  %452 = vmatpush.bf16.msra.mxu0 %v344
  %453 = vmatpush.bf16.msra.mxu0 %v343
  %454 = vmatpush.bf16.msra.mxu0 %v342
  %455 = vmatpush.bf16.msra.mxu0 %v341
  %456 = vmatmul.bf16.gmra.mxu0 %v29
  %v457 = vpop.f32.mrf.mxu0
  %v458 = vadd.f32 %v445, %v457
  %v459 = vpop.f32.mrf.mxu0
  %460 = vdwg.mxu0
  %461 = vmatpush.bf16.msra.mxu0 %v356
  %462 = vmatpush.bf16.msra.mxu0 %v355
  %463 = vmatpush.bf16.msra.mxu0 %v354
  %464 = vmatpush.bf16.msra.mxu0 %v353
  %465 = vmatpush.bf16.msra.mxu0 %v352
  %466 = vmatpush.bf16.msra.mxu0 %v351
  %467 = vmatpush.bf16.msra.mxu0 %v350
  %468 = vmatpush.bf16.msra.mxu0 %v349
  %469 = vmatmul.bf16.gmra.mxu0 %v30
  %v470 = vpop.f32.mrf.mxu0
  %v471 = vadd.f32 %v458, %v470
  %v472 = vpop.f32.mrf.mxu0
  %473 = vdwg.mxu0
  %474 = vmatpush.bf16.msra.mxu0 %v364
  %475 = vmatpush.bf16.msra.mxu0 %v363
  %476 = vmatpush.bf16.msra.mxu0 %v362
  %477 = vmatpush.bf16.msra.mxu0 %v361
  %478 = vmatpush.bf16.msra.mxu0 %v360
  %479 = vmatpush.bf16.msra.mxu0 %v359
  %480 = vmatpush.bf16.msra.mxu0 %v358
  %481 = vmatpush.bf16.msra.mxu0 %v357
  %482 = vmatmul.bf16.gmra.mxu0 %v31
  %v483 = vpop.f32.mrf.mxu0
  %v484 = vadd.f32 %v471, %v483
  %v485 = vpop.f32.mrf.mxu0
  %486 = vdwg.mxu0
  %487 = vmatpush.bf16.msra.mxu0 %v372
  %488 = vmatpush.bf16.msra.mxu0 %v371
  %489 = vmatpush.bf16.msra.mxu0 %v370
  %490 = vmatpush.bf16.msra.mxu0 %v369
  %491 = vmatpush.bf16.msra.mxu0 %v368
  %492 = vmatpush.bf16.msra.mxu0 %v367
  %493 = vmatpush.bf16.msra.mxu0 %v366
  %494 = vmatpush.bf16.msra.mxu0 %v365
  %495 = vmatmul.bf16.gmra.mxu0 %v32
  %v496 = vpop.f32.mrf.mxu0
  %v497 = vadd.f32 %v484, %v496
  %v498 = vpop.f32.mrf.mxu0
  %499 = vdwg.mxu0
  %500 = vmatpush.bf16.msra.mxu0 %v380
  %501 = vmatpush.bf16.msra.mxu0 %v379
  %502 = vmatpush.bf16.msra.mxu0 %v378
  %503 = vmatpush.bf16.msra.mxu0 %v377
  %504 = vmatpush.bf16.msra.mxu0 %v376
  %505 = vmatpush.bf16.msra.mxu0 %v375
  %506 = vmatpush.bf16.msra.mxu0 %v374
  %507 = vmatpush.bf16.msra.mxu0 %v373
  %508 = vmatmul.bf16.gmra.mxu0 %v33
  %v509 = vpop.f32.mrf.mxu0
  %v510 = vadd.f32 %v497, %v509
  %v511 = vpop.f32.mrf.mxu0
  %512 = vdwg.mxu0
  %513 = vmatpush.bf16.msra.mxu0 0
  %514 = vmatpush.bf16.msra.mxu0 0
  %515 = vmatpush.bf16.msra.mxu0 0
  %516 = vmatpush.bf16.msra.mxu0 0
  %517 = vmatpush.bf16.msra.mxu0 0
  %518 = vmatpush.bf16.msra.mxu0 0
  %519 = vmatpush.bf16.msra.mxu0 0
  %520 = vmatpush.bf16.msra.mxu0 %v381
  %521 = vmatmul.bf16.gmra.mxu0 %v433
  %v522 = vpop.f32.mrf.mxu0
  %v523 = vadd.f32 %v510, %v522
  %v524 = vpop.f32.mrf.mxu0
  %525 = vdwg.mxu0
  %v526 = vmax.f32 %v523, 0.0
  %v527 = vpack.c.bf16 %v526, %v526
  %v528 = vld [vmem:[%s3] sm:$0xf]
  %v529 = vld [vmem:[%s3 + $0x4] sm:$0xf]
  %v530 = vld [vmem:[%s3 + $0x8] sm:$0xf]
  %v531 = vld [vmem:[%s3 + $0xc] sm:$0xf]
  %v532 = vld [vmem:[%s3 + $0x10] sm:$0xf]
  %v533 = vld [vmem:[%s3 + $0x14] sm:$0xf]
  %v534 = vld [vmem:[%s3 + $0x18] sm:$0xf]
  %v535 = vld [vmem:[%s3 + $0x1c] sm:$0xf]
  %v536 = vld [vmem:[%s3 + $0x20] sm:$0xf]
  %v537 = vld [vmem:[%s3 + $0x24] sm:$0xf]
  %v538 = vld [vmem:[%s3 + $0x28] sm:$0xf]
  %v539 = vld [vmem:[%s3 + $0x2c] sm:$0xf]
  %v540 = vld [vmem:[%s3 + $0x30] sm:$0xf]
  %v541 = vld [vmem:[%s3 + $0x34] sm:$0xf]
  %v542 = vld [vmem:[%s3 + $0x38] sm:$0xf]
  %v543 = vld [vmem:[%s3 + $0x3c] sm:$0xf]
  %v544 = vld [vmem:[%s4] sm:$0x1]
  %v546 = vperm.slane %v544, 0
  %v564 = vunpack.c.l.b16 %v528
  %v565 = vunpack.c.l.b16 %v529
  %v566 = vunpack.c.l.b16 %v530
  %v567 = vunpack.c.l.b16 %v531
  %v568 = vunpack.c.l.b16 %v532
  %v569 = vunpack.c.l.b16 %v533
  %v570 = vunpack.c.l.b16 %v534
  %v571 = vunpack.c.l.b16 %v535
  %v572 = vunpack.c.l.b16 %v536
  %v573 = vunpack.c.l.b16 %v537
  %v574 = vunpack.c.l.b16 %v538
  %v575 = vunpack.c.l.b16 %v539
  %v576 = vunpack.c.l.b16 %v540
  %v577 = vunpack.c.l.b16 %v541
  %v578 = vunpack.c.l.b16 %v542
  %v579 = vunpack.c.l.b16 %v543
  %v580 = vpack.c.b16 %v565, %v564
  %v581 = vpack.c.b16 %v567, %v566
  %v582 = vpack.c.b16 %v569, %v568
  %v583 = vpack.c.b16 %v571, %v570
  %v584 = vpack.c.b16 %v573, %v572
  %v585 = vpack.c.b16 %v575, %v574
  %v586 = vpack.c.b16 %v577, %v576
  %v587 = vpack.c.b16 %v579, %v578
  %596 = vmatpush.bf16.msra.mxu0 %v587
  %597 = vmatpush.bf16.msra.mxu0 %v586
  %598 = vmatpush.bf16.msra.mxu0 %v585
  %599 = vmatpush.bf16.msra.mxu0 %v584
  %600 = vmatpush.bf16.msra.mxu0 %v583
  %601 = vmatpush.bf16.msra.mxu0 %v582
  %602 = vmatpush.bf16.msra.mxu0 %v581
  %603 = vmatpush.bf16.msra.mxu0 %v580
  %604 = vmatmul.bf16.gmra.mxu0 %v527
  %v605 = vpop.f32.mrf.mxu0
  %v606 = vadd.f32 %v546, %v605
  %v607 = vpop.f32.mrf.mxu0
  %608 = vdwg.mxu0
  %v609 = vpack.c.bf16 %v606, %v606
  %610 = vst [vmem:[%s5] sm:$0xf] %v609
  // Predicated region
  $region22: #{dnn_forward.1} parent=0 // pred_check
    _
  $region23: #{dnn_forward.1} parent=0 // pred_check_branch
    %612 = sbr.rel (0) target = $region25
  $region24: #{dnn_forward.1} parent=0 // pred_region
    _
  $region25: #{dnn_forward.1} parent=0 // pred_fallthru
    _
  // Predicated region
  $region26: #{dnn_forward.1} parent=0 // pred_check
    _
  $region27: #{dnn_forward.1} parent=0 // pred_check_branch
    %614 = sbr.rel (0) target = $region29
  $region28: #{dnn_forward.1} parent=0 // pred_region
    _
  $region29: #{dnn_forward.1} parent=0 // pred_fallthru
    _

</llo_original>
